<compile_context>
chip_gen: v7x
topology: tpu7x:2x2x1
jax: 0.10.0
libtpu: 0.0.40
codegen_flags: <defaults>
</compile_context>

<pallas_src>
import numpy as np
import jax
import jax.numpy as jnp
from jax import lax
from jax.experimental import pallas as pl
from jax.experimental.pallas import tpu as pltpu

EPS = 1e-5
COUT = 8   # reconciled channel count (see TODO above)
CIN = 3


def _model_kernel(x_ref, w_ref, g_ref, out_ref):
    # Single MXU push. Rows of y:
    #   0:8   v3 = w1@x1p + w2@x2p
    #   8:16  v8 = w4@x1p + b4
    #   16:24 v9 = v7 + v8
    #   24:32 v7 = w3@x3p
    #   32:40 v2 = w2@x2p
    y = jnp.dot(w_ref[...], x_ref[...], preferred_element_type=jnp.float32)

    out_ref[0:16, :] = y[0:16, :]                 # [v3 ; v8]

    # v4/v5/v6 in the original forward are dead code (never feed the outputs).

    # Batched training-mode BatchNorm over the stacked (24, P) tensor
    # [v9; v7; v2]: one sum + one sum-of-squares cross-lane pass.
    # NOTE: single-pass var = E[x^2] - mean^2 is fine at 1e-3 tolerance for
    # unit-scale inputs; switch to two-pass if tolerances tighten.
    t = y[16:40, :]
    inv_p = jnp.float32(1.0 / t.shape[-1])
    mean = jnp.sum(t, axis=1, keepdims=True) * inv_p
    ex2 = jnp.sum(t * t, axis=1, keepdims=True) * inv_p
    var = ex2 - mean * mean
    bn = (t - mean) * lax.rsqrt(var + EPS)        # rsqrt -> EUP slot (free)

    v10 = bn[0:8, :]                              # bn3(v9)
    v11 = bn[8:16, :]                              # bn4(v7)
    v12 = bn[16:24, :]                             # bn5(v2)
    out_ref[16:24, :] = v12

    s1 = v12 * (v10 * v11)                        # (8, P)

    # torch: s1.reshape(Hp, Wp, -1).sum(-1).div(Wp) == grouped sums of 8
    # consecutive NCHW-flat elements, done on the otherwise-idle MXU against a
    # constant (P, P) grouping matrix (zero beyond column P//COUT, /Wp folded
    # in) so the store stays lane-dense inside the single output slab.
    out_ref[24:32, :] = jnp.dot(s1, g_ref[...], preferred_element_type=jnp.float32)


def prepare_params(params, Hp, Wp):
    """Parameter-only preprocessing; done ONCE outside the per-call path."""
    w1, w2, w3, w4, b4 = (jnp.asarray(p, jnp.float32) for p in params)
    P = Hp * Wp
    assert P % COUT == 0, "padded spatial size must be a multiple of 8"

    z = jnp.zeros((COUT, CIN), jnp.float32)
    zb = jnp.zeros((COUT, 1), jnp.float32)
    b4c = b4.reshape(COUT, 1)
    w_blk = jnp.concatenate([
        jnp.concatenate([w1, w2, z, zb], axis=1),    # v3
        jnp.concatenate([w4, z, z, b4c], axis=1),    # v8  (bias folded in)
        jnp.concatenate([w4, z, w3, b4c], axis=1),   # v9 = v7 + v8
        jnp.concatenate([z, z, w3, zb], axis=1),     # v7
        jnp.concatenate([z, w2, z, zb], axis=1),     # v2
    ], axis=0)                                       # (40, 10)

    # Grouping matrix: column j (< P//COUT) sums the 8 consecutive NCHW-flat
    # elements of group j and scales by 1/Wp; columns >= P//COUT are zero so
    # the s2 rows of the output slab stay lane-dense.
    g = np.zeros((P, P), np.float32)
    g[np.arange(P), np.arange(P) // COUT] = 1.0 / Wp
    return w_blk, jnp.asarray(g)


@jax.jit
def model_forward(x1, x2, x3, w_blk, g):
    N, Cin, H, W = x1.shape
    assert N == 1 and Cin == CIN, "kernel specialized to N=1, Cin=3"
    Hp, Wp = H + 2, W + 2
    P = Hp * Wp
    # The s2 group<->pixel mapping below relies on COUT == 8 and N == 1.
    assert P % COUT == 0 and COUT == 8
    assert g.shape == (P, P) and w_blk.shape == (5 * COUT, 3 * CIN + 1)

    # Fused pad + stack of the three activations (single XLA fusion inside the
    # jit): rows are [x1 c0..c2, x2 c0..c2, x3 c0..c2, ones] -> (10, P).
    x = jnp.stack([x1, x2, x3], axis=0).astype(jnp.float32)   # (3, 1, 3, H, W)
    xp = jnp.pad(x, ((0, 0), (0, 0), (0, 0), (1, 1), (1, 1)))
    x_blk = jnp.concatenate(
        [xp.reshape(3 * CIN, P), jnp.ones((1, P), jnp.float32)], axis=0)

    vmem = pl.BlockSpec(memory_space=pltpu.MemorySpace.VMEM)
    out = pl.pallas_call(
        _model_kernel,
        out_shape=jax.ShapeDtypeStruct((4 * COUT, P), jnp.float32),
        in_specs=[vmem, vmem, vmem],
        out_specs=vmem,
        # grid=() on purpose: latency-bound, <0.5 MiB working set; a grid
        # would only add ~0.35 us/step pipeline overhead.
        # TODO(synk): if ever run batched (N>1), add a leading parallel grid
        # axis over batch to engage v7x's second TensorCore.
    )(x_blk, w_blk, g)

    v3 = out[0:COUT].reshape(1, COUT, Hp, Wp)
    v8 = out[COUT:2 * COUT].reshape(1, COUT, Hp, Wp)
    v12 = out[2 * COUT:3 * COUT].reshape(1, COUT, Hp, Wp)
    s2 = out[3 * COUT:, :P // COUT].reshape(Hp, Wp)   # /Wp already folded in
    return v3, v8, v12, s2


def reference(x1, x2, x3, params):
    """Pure-JAX reference mirroring the (reconciled) PyTorch forward."""
    w1, w2, w3, w4, b4 = params

    def conv(x, w, b=None):
        xp = jnp.pad(x, ((0, 0), (0, 0), (1, 1), (1, 1)))
        y = jnp.einsum('oc,nchw->nohw', w, xp)
        if b is not None:
            y = y + b.reshape(1, -1, 1, 1)
        return y

    def bn(t):
        mean = t.mean(axis=(0, 2, 3), keepdims=True)
        var = ((t - mean) ** 2).mean(axis=(0, 2, 3), keepdims=True)
        return (t - mean) / jnp.sqrt(var + EPS)

    v1 = conv(x1, w1)
    v2 = conv(x2, w2)
    v3 = v1 + v2
    v7 = conv(x3, w3)
    v8 = conv(x1, w4, b4)
    v9 = v7 + v8
    v10 = bn(v9)
    v11 = bn(v7)
    m_ = v10 * v11
    v12 = bn(v2)
    s1 = v12 * m_
    n, k = s1.shape[-2:]
    s2 = s1.reshape(n, k, -1).sum(-1) / k
    return v3, v8, v12, s2


if __name__ == "__main__":
    key = jax.random.PRNGKey(0)
    ks = jax.random.split(key, 8)

    H = W = 14                                    # padded -> 16x16, P = 256
    x1 = jax.random.normal(ks[0], (1, CIN, H, W), jnp.float32)
    x2 = jax.random.normal(ks[1], (1, CIN, H, W), jnp.float32)
    x3 = jax.random.normal(ks[2], (1, CIN, H, W), jnp.float32)

    # Deterministic synthetic parameters (1x1 conv weights as (Cout, Cin)).
    w1 = jax.random.normal(ks[3], (COUT, CIN), jnp.float32) * 0.1
    w2 = jax.random.normal(ks[4], (COUT, CIN), jnp.float32) * 0.1
    w3 = jax.random.normal(ks[5], (COUT, CIN), jnp.float32) * 0.1
    w4 = jax.random.normal(ks[6], (COUT, CIN), jnp.float32) * 0.1
    b4 = jax.random.normal(ks[7], (COUT,), jnp.float32) * 0.1
    params = (w1, w2, w3, w4, b4)

    # Parameter-only preprocessing done once, outside the per-call path.
    w_blk, g = prepare_params(params, H + 2, W + 2)

    outs = jax.block_until_ready(model_forward(x1, x2, x3, w_blk, g))
    refs = jax.block_until_ready(reference(x1, x2, x3, params))

    for got, want in zip(outs, refs):
        assert got.shape == want.shape, (got.shape, want.shape)
        assert jnp.allclose(got, want, rtol=1e-3, atol=1e-3), \
            float(jnp.max(jnp.abs(got - want)))

    print("KERNEL_OK")
</pallas_src>

<mosaic_0001>
module attributes {stable_mosaic.version = 11 : i64} {
  func.func @_model_kernel(%arg0: memref<10x256xf32, #tpu.memory_space<vmem>>, %arg1: memref<40x10xf32, #tpu.memory_space<vmem>>, %arg2: memref<256x256xf32, #tpu.memory_space<vmem>>, %arg3: memref<32x256xf32, #tpu.memory_space<vmem>>) attributes {dimension_semantics = [], scalar_prefetch = 0 : i64, scratch_operands = 0 : i64, tpu.core_type = #tpu.core_type<tc>} {
    %c0 = arith.constant 0 : index
    %c0_0 = arith.constant 0 : index
    %0 = vector.load %arg1[%c0, %c0_0] : memref<40x10xf32, #tpu.memory_space<vmem>>, vector<40x10xf32>
    %c0_1 = arith.constant 0 : index
    %c0_2 = arith.constant 0 : index
    %1 = vector.load %arg0[%c0_1, %c0_2] : memref<10x256xf32, #tpu.memory_space<vmem>>, vector<10x256xf32>
    %cst = arith.constant dense<0.000000e+00> : vector<40x256xf32>
    %2 = tpu.matmul %0, %1, %cst {dimension_numbers = #tpu.dot_dimension_numbers<[1], [0], [0], [1], [0, 0, 1, 1], [], []>} : vector<40x10xf32>, vector<10x256xf32>, vector<40x256xf32> -> vector<40x256xf32>
    %3 = vector.extract_strided_slice %2 {offsets = [0, 0], sizes = [16, 256], strides = [1, 1]} : vector<40x256xf32> to vector<16x256xf32>
    %c0_3 = arith.constant 0 : index
    %c0_4 = arith.constant 0 : index
    %4 = vector.load %arg3[%c0_3, %c0_4] : memref<32x256xf32, #tpu.memory_space<vmem>>, vector<16x256xf32>
    tpu.vector_store %arg3[%c0_3, %c0_4], %3 {strides = array<i32>} : memref<32x256xf32, #tpu.memory_space<vmem>>, vector<16x256xf32>,
    %5 = vector.extract_strided_slice %2 {offsets = [16, 0], sizes = [24, 256], strides = [1, 1]} : vector<40x256xf32> to vector<24x256xf32>
    %cst_5 = arith.constant dense<0.000000e+00> : vector<24xf32>
    %6 = vector.multi_reduction <add>, %5, %cst_5 [1] : vector<24x256xf32> to vector<24xf32>
    %7 = vector.shape_cast %6 : vector<24xf32> to vector<24x1xf32>
    %cst_6 = arith.constant 3.906250e-03 : f32
    %8 = vector.broadcast %cst_6 : f32 to vector<24x1xf32>
    %9 = arith.mulf %7, %8 : vector<24x1xf32>
    %10 = arith.mulf %5, %5 : vector<24x256xf32>
    %cst_7 = arith.constant dense<0.000000e+00> : vector<24xf32>
    %11 = vector.multi_reduction <add>, %10, %cst_7 [1] : vector<24x256xf32> to vector<24xf32>
    %12 = vector.shape_cast %11 : vector<24xf32> to vector<24x1xf32>
    %cst_8 = arith.constant 3.906250e-03 : f32
    %13 = vector.broadcast %cst_8 : f32 to vector<24x1xf32>
    %14 = arith.mulf %12, %13 : vector<24x1xf32>
    %15 = arith.mulf %9, %9 : vector<24x1xf32>
    %16 = arith.subf %14, %15 : vector<24x1xf32>
    %17 = vector.broadcast %9 : vector<24x1xf32> to vector<24x256xf32>
    %18 = arith.subf %5, %17 : vector<24x256xf32>
    %cst_9 = arith.constant 9.99999974E-6 : f32
    %19 = vector.broadcast %cst_9 : f32 to vector<24x1xf32>
    %20 = arith.addf %16, %19 : vector<24x1xf32>
    %21 = math.rsqrt %20 : vector<24x1xf32>
    %22 = vector.broadcast %21 : vector<24x1xf32> to vector<24x256xf32>
    %23 = arith.mulf %18, %22 : vector<24x256xf32>
    %24 = vector.extract_strided_slice %23 {offsets = [0, 0], sizes = [8, 256], strides = [1, 1]} : vector<24x256xf32> to vector<8x256xf32>
    %25 = vector.extract_strided_slice %23 {offsets = [8, 0], sizes = [8, 256], strides = [1, 1]} : vector<24x256xf32> to vector<8x256xf32>
    %26 = vector.extract_strided_slice %23 {offsets = [16, 0], sizes = [8, 256], strides = [1, 1]} : vector<24x256xf32> to vector<8x256xf32>
    %c16 = arith.constant 16 : index
    %c0_10 = arith.constant 0 : index
    %27 = vector.load %arg3[%c16, %c0_10] : memref<32x256xf32, #tpu.memory_space<vmem>>, vector<8x256xf32>
    tpu.vector_store %arg3[%c16, %c0_10], %26 {strides = array<i32>} : memref<32x256xf32, #tpu.memory_space<vmem>>, vector<8x256xf32>,
    %28 = arith.mulf %24, %25 : vector<8x256xf32>
    %29 = arith.mulf %26, %28 : vector<8x256xf32>
    %c0_11 = arith.constant 0 : index
    %c0_12 = arith.constant 0 : index
    %30 = vector.load %arg2[%c0_11, %c0_12] : memref<256x256xf32, #tpu.memory_space<vmem>>, vector<256x256xf32>
    %cst_13 = arith.constant dense<0.000000e+00> : vector<8x256xf32>
    %31 = tpu.matmul %29, %30, %cst_13 {dimension_numbers = #tpu.dot_dimension_numbers<[1], [0], [0], [1], [0, 0, 1, 1], [], []>} : vector<8x256xf32>, vector<256x256xf32>, vector<8x256xf32> -> vector<8x256xf32>
    %c24 = arith.constant 24 : index
    %c0_14 = arith.constant 0 : index
    %32 = vector.load %arg3[%c24, %c0_14] : memref<32x256xf32, #tpu.memory_space<vmem>>, vector<8x256xf32>
    tpu.vector_store %arg3[%c24, %c0_14], %31 {strides = array<i32>} : memref<32x256xf32, #tpu.memory_space<vmem>>, vector<8x256xf32>,
    return
  }
}

</mosaic_0001>

<llo_original>
// kernel: model_forward.1
$region0: #{model_forward.1}
  #allocation0 [shape = 'u32[]', space=smem, size = 0x4, offset = 0x4, fixed_abs, tag = 'smem constant byte address 0x4 - core index']
  #allocation1 [shape = 'u32[144,128]{1,0:T(1,128)}', space=vmem, size = 0x12000, scoped, tag = 'internal scratch']
  %s0 = inlined_call_operand.vmem [shape: f32[10,256], index: 0, kind: input, shape index: {}]
  %s1 = inlined_call_operand.vmem [shape: f32[40,10], index: 1, kind: input, shape index: {}]
  %s2 = inlined_call_operand.vmem [shape: f32[256,256], index: 2, kind: input, shape index: {}]
  %s3 = inlined_call_operand.vmem [shape: f32[32,256], index: 3, kind: output, shape index: {}]
  %s4 = sld [smem:[#allocation0]]
  $region22: #{model_forward.1} parent=0
    _
  %s6 = ssub.s32 1, %s4
  %s7 = scalar_select 0, %s6, %s4
  // Predicated region
  $region2: #{model_forward.1} parent=0 // pred_check
    _
  $region3: #{model_forward.1} parent=0 // pred_check_branch
    %9 = sbr.rel (0) target = $region5
  $region4: #{model_forward.1} parent=0 // pred_region
    _
  $region5: #{model_forward.1} parent=0 // pred_fallthru
    _
  // Predicated region
  $region6: #{model_forward.1} parent=0 // pred_check
    _
  $region7: #{model_forward.1} parent=0 // pred_check_branch
    %11 = sbr.rel (0) target = $region9
  $region8: #{model_forward.1} parent=0 // pred_region
    _
  $region9: #{model_forward.1} parent=0 // pred_fallthru
    _
  // Predicated region
  $region10: #{model_forward.1} parent=0 // pred_check
    _
  $region11: #{model_forward.1} parent=0 // pred_check_branch
    %13 = sbr.rel (0) target = $region13
  $region12: #{model_forward.1} parent=0 // pred_region
    _
  $region13: #{model_forward.1} parent=0 // pred_fallthru
    _
  %v14 = vld [vmem:[%s1] sm:$0xff]
  %v15 = vld [vmem:[%s1 + $0x8] sm:$0xff]
  %v16 = vld [vmem:[%s1 + $0x10] sm:$0xff]
  %v17 = vld [vmem:[%s1 + $0x18] sm:$0xff]
  %v18 = vld [vmem:[%s1 + $0x20] sm:$0xff]
  %v19 = vld [vmem:[%s0] sm:$0xff]
  %v20 = vld [vmem:[%s0 + $0x8] sm:$0xff]
  %v21 = vld [vmem:[%s0 + $0x10] sm:$0x3]
  %v22 = vld [vmem:[%s0 + $0x18] sm:$0x3]
  %vm23 = vcmask 80896
  %v25 = vsel %vm23, %v14, 0
  %v28 = vsel %vm23, %v15, 0
  %v31 = vsel %vm23, %v16, 0
  %v34 = vsel %vm23, %v17, 0
  %v37 = vsel %vm23, %v18, 0
  %vm39 = vcmask 1041408
  %v41 = vsel %vm39, %v21, 0
  %v44 = vsel %vm39, %v22, 0
  %46 = vmatprep.subr.mxu0 %v20
  %47 = vmatpush1.msra.mxu0 %v19
  %48 = vmatprep.subr.mxu0 %v44
  %49 = vmatpush1.msra.mxu0 %v41
  %50 = vmatprep.subr.mxu0 0.0
  %51 = vmatpush1.msra.mxu0 0.0
  %52 = vmatprep.subr.mxu0 0.0
  %53 = vmatpush1.msra.mxu0 0.0
  %54 = vmatprep.subr.mxu0 0.0
  %55 = vmatpush1.msra.mxu0 0.0
  %56 = vmatprep.subr.mxu0 0.0
  %57 = vmatpush1.msra.mxu0 0.0
  %58 = vmatprep.subr.mxu0 0.0
  %59 = vmatpush1.msra.mxu0 0.0
  %60 = vmatprep.subr.mxu0 0.0
  %61 = vmatpush1.msra.mxu0 0.0
  %62 = vmatprep.subr.mxu0 0.0
  %63 = vmatpush1.msra.mxu0 0.0
  %64 = vmatprep.subr.mxu0 0.0
  %65 = vmatpush1.msra.mxu0 0.0
  %66 = vmatprep.subr.mxu0 0.0
  %67 = vmatpush1.msra.mxu0 0.0
  %68 = vmatprep.subr.mxu0 0.0
  %69 = vmatpush1.msra.mxu0 0.0
  %70 = vmatprep.subr.mxu0 0.0
  %71 = vmatpush1.msra.mxu0 0.0
  %72 = vmatprep.subr.mxu0 0.0
  %73 = vmatpush1.msra.mxu0 0.0
  %74 = vmatprep.subr.mxu0 0.0
  %75 = vmatpush1.msra.mxu0 0.0
  %76 = vmatprep.subr.mxu0 0.0
  %77 = vmatpush1.msra.mxu0 0.0
  %78 = vmatprep.subr.mxu0 0.0
  %79 = vmatpush1.msra.mxu0 0.0
  %80 = vmatprep.subr.mxu0 0.0
  %81 = vmatpush1.msra.mxu0 0.0
  %82 = vmatprep.subr.mxu0 0.0
  %83 = vmatpush1.msra.mxu0 0.0
  %84 = vmatprep.subr.mxu0 0.0
  %85 = vmatpush1.msra.mxu0 0.0
  %86 = vmatprep.subr.mxu0 0.0
  %87 = vmatpush1.msra.mxu0 0.0
  %88 = vmatprep.subr.mxu0 0.0
  %89 = vmatpush1.msra.mxu0 0.0
  %90 = vmatprep.subr.mxu0 0.0
  %91 = vmatpush1.msra.mxu0 0.0
  %92 = vmatprep.subr.mxu0 0.0
  %93 = vmatpush1.msra.mxu0 0.0
  %94 = vmatprep.subr.mxu0 0.0
  %95 = vmatpush1.msra.mxu0 0.0
  %96 = vmatprep.subr.mxu0 0.0
  %97 = vmatpush1.msra.mxu0 0.0
  %98 = vmatprep.subr.mxu0 0.0
  %99 = vmatpush1.msra.mxu0 0.0
  %100 = vmatprep.subr.mxu0 0.0
  %101 = vmatpush1.msra.mxu0 0.0
  %102 = vmatprep.subr.mxu0 0.0
  %103 = vmatpush1.msra.mxu0 0.0
  %104 = vmatprep.subr.mxu0 0.0
  %105 = vmatpush1.msra.mxu0 0.0
  %106 = vmatprep.subr.mxu0 0.0
  %107 = vmatpush1.msra.mxu0 0.0
  %108 = vmatprep.subr.mxu0 0.0
  %109 = vmatpush1.msra.mxu0 0.0
  %110 = vmatprep.mubr.f32.mxu0 0.0
  %111 = vmatmul.mubr.f32.gmra.mrb[0].mxu0 %v25
  %v112 = vpop.f32.mrb[0].mxu0
  %v113 = vadd.f32 0.0, %v112
  %v114 = vpop.f32.mrb[0].mxu0
  %v115 = vadd.f32 0.0, %v114
  %116 = vmatprep.mubr.f32.mxu0 0.0
  %117 = vmatmul.mubr.f32.gmra.mrb[0].mxu0 %v28
  %v118 = vpop.f32.mrb[0].mxu0
  %v119 = vadd.f32 0.0, %v118
  %v120 = vpop.f32.mrb[0].mxu0
  %v121 = vadd.f32 0.0, %v120
  %122 = vmatprep.mubr.f32.mxu0 0.0
  %123 = vmatmul.mubr.f32.gmra.mrb[0].mxu0 %v31
  %v124 = vpop.f32.mrb[0].mxu0
  %v125 = vadd.f32 0.0, %v124
  %v126 = vpop.f32.mrb[0].mxu0
  %v127 = vadd.f32 0.0, %v126
  %128 = vmatprep.mubr.f32.mxu0 0.0
  %129 = vmatmul.mubr.f32.gmra.mrb[0].mxu0 %v34
  %v130 = vpop.f32.mrb[0].mxu0
  %v131 = vadd.f32 0.0, %v130
  %v132 = vpop.f32.mrb[0].mxu0
  %v133 = vadd.f32 0.0, %v132
  %134 = vmatprep.mubr.f32.mxu0 0.0
  %135 = vmatmul.mubr.f32.gmra.mrb[0].mxu0 %v37
  %v136 = vpop.f32.mrb[0].mxu0
  %v137 = vadd.f32 0.0, %v136
  %v138 = vpop.f32.mrb[0].mxu0
  %v139 = vadd.f32 0.0, %v138
  %140 = vdwg.mxu0
  %141 = vst [vmem:[%s3] sm:$0xff] %v113
  %142 = vst [vmem:[%s3 + $0x8] sm:$0xff] %v115
  %143 = vst [vmem:[%s3 + $0x10] sm:$0xff] %v119
  %144 = vst [vmem:[%s3 + $0x18] sm:$0xff] %v121
  %v145 = vadd.f32 %v125, %v127
  %146 = vadd.xlane.f32.xlu0 %v145
  %v147 = vpop.xlane.xlu0 %146
  %v148 = vadd.f32 %v131, %v133
  %149 = vadd.xlane.f32.xlu0 %v148
  %v150 = vpop.xlane.xlu0 %149
  %v151 = vadd.f32 %v137, %v139
  %152 = vadd.xlane.f32.xlu0 %v151
  %v153 = vpop.xlane.xlu0 %152
  %v154 = vmul.f32 %v147, 0.00390625
  %v155 = vmul.f32 %v150, 0.00390625
  %v156 = vmul.f32 %v153, 0.00390625
  %v157 = vmul.f32 %v125, %v125
  %v158 = vmul.f32 %v127, %v127
  %v159 = vmul.f32 %v131, %v131
  %v160 = vmul.f32 %v133, %v133
  %v161 = vmul.f32 %v137, %v137
  %v162 = vmul.f32 %v139, %v139
  %v163 = vadd.f32 %v157, %v158
  %164 = vadd.xlane.f32.xlu0 %v163
  %v165 = vpop.xlane.xlu0 %164
  %v166 = vadd.f32 %v159, %v160
  %167 = vadd.xlane.f32.xlu0 %v166
  %v168 = vpop.xlane.xlu0 %167
  %v169 = vadd.f32 %v161, %v162
  %170 = vadd.xlane.f32.xlu0 %v169
  %v171 = vpop.xlane.xlu0 %170
  %v172 = vmul.f32 %v165, 0.00390625
  %v173 = vmul.f32 %v168, 0.00390625
  %v174 = vmul.f32 %v171, 0.00390625
  %v175 = vmul.f32 %v154, %v154
  %v176 = vmul.f32 %v155, %v155
  %v177 = vmul.f32 %v156, %v156
  %v178 = vsub.f32 %v172, %v175
  %v179 = vsub.f32 %v173, %v176
  %v180 = vsub.f32 %v174, %v177
  %v181 = vsub.f32 %v125, %v154
  %v182 = vsub.f32 %v127, %v154
  %v183 = vsub.f32 %v131, %v155
  %v184 = vsub.f32 %v133, %v155
  %v185 = vsub.f32 %v137, %v156
  %v186 = vsub.f32 %v139, %v156
  %v187 = vadd.f32 %v178, 1e-05
  %v188 = vadd.f32 %v179, 1e-05
  %v189 = vadd.f32 %v180, 1e-05
  %v190 = vrsqrt.pop %v187
  %v191 = vrsqrt.pop %v188
  %v192 = vrsqrt.pop %v189
  %v193 = vmul.f32 %v181, %v190
  %v194 = vmul.f32 %v182, %v190
  %v195 = vmul.f32 %v183, %v191
  %v196 = vmul.f32 %v184, %v191
  %v197 = vmul.f32 %v185, %v192
  %v198 = vmul.f32 %v186, %v192
  %199 = vst [vmem:[%s3 + $0x20] sm:$0xff] %v197
  %200 = vst [vmem:[%s3 + $0x28] sm:$0xff] %v198
  %v201 = vmul.f32 %v193, %v195
  %v202 = vmul.f32 %v194, %v196
  %v203 = vmul.f32 %v197, %v201
  %v204 = vmul.f32 %v198, %v202
  %v205 = vld [vmem:[%s2] sm:$0xff]
  %v206 = vld [vmem:[%s2 + $0x8] sm:$0xff]
  %v207 = vld [vmem:[%s2 + $0x10] sm:$0xff]
  %v208 = vld [vmem:[%s2 + $0x18] sm:$0xff]
  %v209 = vld [vmem:[%s2 + $0x20] sm:$0xff]
  %v210 = vld [vmem:[%s2 + $0x28] sm:$0xff]
  %v211 = vld [vmem:[%s2 + $0x30] sm:$0xff]
  %v212 = vld [vmem:[%s2 + $0x38] sm:$0xff]
  %v213 = vld [vmem:[%s2 + $0x40] sm:$0xff]
  %v214 = vld [vmem:[%s2 + $0x48] sm:$0xff]
  %v215 = vld [vmem:[%s2 + $0x50] sm:$0xff]
  %v216 = vld [vmem:[%s2 + $0x58] sm:$0xff]
  %v217 = vld [vmem:[%s2 + $0x60] sm:$0xff]
  %v218 = vld [vmem:[%s2 + $0x68] sm:$0xff]
  %v219 = vld [vmem:[%s2 + $0x70] sm:$0xff]
  %v220 = vld [vmem:[%s2 + $0x78] sm:$0xff]
  %v221 = vld [vmem:[%s2 + $0x80] sm:$0xff]
  %v222 = vld [vmem:[%s2 + $0x88] sm:$0xff]
  %v223 = vld [vmem:[%s2 + $0x90] sm:$0xff]
  %v224 = vld [vmem:[%s2 + $0x98] sm:$0xff]
  %v225 = vld [vmem:[%s2 + $0xa0] sm:$0xff]
  %v226 = vld [vmem:[%s2 + $0xa8] sm:$0xff]
  %v227 = vld [vmem:[%s2 + $0xb0] sm:$0xff]
  %v228 = vld [vmem:[%s2 + $0xb8] sm:$0xff]
  %v229 = vld [vmem:[%s2 + $0xc0] sm:$0xff]
  %v230 = vld [vmem:[%s2 + $0xc8] sm:$0xff]
  %v231 = vld [vmem:[%s2 + $0xd0] sm:$0xff]
  %v232 = vld [vmem:[%s2 + $0xd8] sm:$0xff]
  %v233 = vld [vmem:[%s2 + $0xe0] sm:$0xff]
  %v234 = vld [vmem:[%s2 + $0xe8] sm:$0xff]
  %v235 = vld [vmem:[%s2 + $0xf0] sm:$0xff]
  %v236 = vld [vmem:[%s2 + $0xf8] sm:$0xff]
  %v237 = vld [vmem:[%s2 + $0x100] sm:$0xff]
  %v238 = vld [vmem:[%s2 + $0x108] sm:$0xff]
  %v239 = vld [vmem:[%s2 + $0x110] sm:$0xff]
  %v240 = vld [vmem:[%s2 + $0x118] sm:$0xff]
  %v241 = vld [vmem:[%s2 + $0x120] sm:$0xff]
  %v242 = vld [vmem:[%s2 + $0x128] sm:$0xff]
  %v243 = vld [vmem:[%s2 + $0x130] sm:$0xff]
  %v244 = vld [vmem:[%s2 + $0x138] sm:$0xff]
  %v245 = vld [vmem:[%s2 + $0x140] sm:$0xff]
  %v246 = vld [vmem:[%s2 + $0x148] sm:$0xff]
  %v247 = vld [vmem:[%s2 + $0x150] sm:$0xff]
  %v248 = vld [vmem:[%s2 + $0x158] sm:$0xff]
  %v249 = vld [vmem:[%s2 + $0x160] sm:$0xff]
  %v250 = vld [vmem:[%s2 + $0x168] sm:$0xff]
  %v251 = vld [vmem:[%s2 + $0x170] sm:$0xff]
  %v252 = vld [vmem:[%s2 + $0x178] sm:$0xff]
  %v253 = vld [vmem:[%s2 + $0x180] sm:$0xff]
  %v254 = vld [vmem:[%s2 + $0x188] sm:$0xff]
  %v255 = vld [vmem:[%s2 + $0x190] sm:$0xff]
  %v256 = vld [vmem:[%s2 + $0x198] sm:$0xff]
  %v257 = vld [vmem:[%s2 + $0x1a0] sm:$0xff]
  %v258 = vld [vmem:[%s2 + $0x1a8] sm:$0xff]
  %v259 = vld [vmem:[%s2 + $0x1b0] sm:$0xff]
  %v260 = vld [vmem:[%s2 + $0x1b8] sm:$0xff]
  %v261 = vld [vmem:[%s2 + $0x1c0] sm:$0xff]
  %v262 = vld [vmem:[%s2 + $0x1c8] sm:$0xff]
  %v263 = vld [vmem:[%s2 + $0x1d0] sm:$0xff]
  %v264 = vld [vmem:[%s2 + $0x1d8] sm:$0xff]
  %v265 = vld [vmem:[%s2 + $0x1e0] sm:$0xff]
  %v266 = vld [vmem:[%s2 + $0x1e8] sm:$0xff]
  %v267 = vld [vmem:[%s2 + $0x1f0] sm:$0xff]
  %v268 = vld [vmem:[%s2 + $0x1f8] sm:$0xff]
  %269 = vmatprep.subr.mxu0 %v206
  %270 = vmatpush1.msra.mxu0 %v205
  %271 = vmatprep.subr.mxu0 %v208
  %272 = vmatpush1.msra.mxu0 %v207
  %273 = vmatprep.subr.mxu0 %v210
  %274 = vmatpush1.msra.mxu0 %v209
  %275 = vmatprep.subr.mxu0 %v212
  %276 = vmatpush1.msra.mxu0 %v211
  %277 = vmatprep.subr.mxu0 %v214
  %278 = vmatpush1.msra.mxu0 %v213
  %279 = vmatprep.subr.mxu0 %v216
  %280 = vmatpush1.msra.mxu0 %v215
  %281 = vmatprep.subr.mxu0 %v218
  %282 = vmatpush1.msra.mxu0 %v217
  %283 = vmatprep.subr.mxu0 %v220
  %284 = vmatpush1.msra.mxu0 %v219
  %285 = vmatprep.subr.mxu0 %v222
  %286 = vmatpush1.msra.mxu0 %v221
  %287 = vmatprep.subr.mxu0 %v224
  %288 = vmatpush1.msra.mxu0 %v223
  %289 = vmatprep.subr.mxu0 %v226
  %290 = vmatpush1.msra.mxu0 %v225
  %291 = vmatprep.subr.mxu0 %v228
  %292 = vmatpush1.msra.mxu0 %v227
  %293 = vmatprep.subr.mxu0 %v230
  %294 = vmatpush1.msra.mxu0 %v229
  %295 = vmatprep.subr.mxu0 %v232
  %296 = vmatpush1.msra.mxu0 %v231
  %297 = vmatprep.subr.mxu0 %v234
  %298 = vmatpush1.msra.mxu0 %v233
  %299 = vmatprep.subr.mxu0 %v236
  %300 = vmatpush1.msra.mxu0 %v235
  %301 = vmatprep.subr.mxu0 %v238
  %302 = vmatpush1.msra.mxu0 %v237
  %303 = vmatprep.subr.mxu0 %v240
  %304 = vmatpush1.msra.mxu0 %v239
  %305 = vmatprep.subr.mxu0 %v242
  %306 = vmatpush1.msra.mxu0 %v241
  %307 = vmatprep.subr.mxu0 %v244
  %308 = vmatpush1.msra.mxu0 %v243
  %309 = vmatprep.subr.mxu0 %v246
  %310 = vmatpush1.msra.mxu0 %v245
  %311 = vmatprep.subr.mxu0 %v248
  %312 = vmatpush1.msra.mxu0 %v247
  %313 = vmatprep.subr.mxu0 %v250
  %314 = vmatpush1.msra.mxu0 %v249
  %315 = vmatprep.subr.mxu0 %v252
  %316 = vmatpush1.msra.mxu0 %v251
  %317 = vmatprep.subr.mxu0 %v254
  %318 = vmatpush1.msra.mxu0 %v253
  %319 = vmatprep.subr.mxu0 %v256
  %320 = vmatpush1.msra.mxu0 %v255
  %321 = vmatprep.subr.mxu0 %v258
  %322 = vmatpush1.msra.mxu0 %v257
  %323 = vmatprep.subr.mxu0 %v260
  %324 = vmatpush1.msra.mxu0 %v259
  %325 = vmatprep.subr.mxu0 %v262
  %326 = vmatpush1.msra.mxu0 %v261
  %327 = vmatprep.subr.mxu0 %v264
  %328 = vmatpush1.msra.mxu0 %v263
  %329 = vmatprep.subr.mxu0 %v266
  %330 = vmatpush1.msra.mxu0 %v265
  %331 = vmatprep.subr.mxu0 %v268
  %332 = vmatpush1.msra.mxu0 %v267
  %333 = vmatprep.mubr.f32.mxu0 %v204
  %334 = vmatmul.mubr.f32.gmra.mrb[0].mxu0 %v203
  %v335 = vpop.f32.mrb[0].mxu0
  %v336 = vadd.f32 0.0, %v335
  %v337 = vpop.f32.mrb[0].mxu0
  %v338 = vadd.f32 0.0, %v337
  %339 = vdwg.mxu0
  %340 = vst [vmem:[%s3 + $0x30] sm:$0xff] %v336
  %341 = vst [vmem:[%s3 + $0x38] sm:$0xff] %v338
  // Predicated region
  $region14: #{model_forward.1} parent=0 // pred_check
    _
  $region15: #{model_forward.1} parent=0 // pred_check_branch
    %343 = sbr.rel (0) target = $region17
  $region16: #{model_forward.1} parent=0 // pred_region
    _
  $region17: #{model_forward.1} parent=0 // pred_fallthru
    _
  // Predicated region
  $region18: #{model_forward.1} parent=0 // pred_check
    _
  $region19: #{model_forward.1} parent=0 // pred_check_branch
    %345 = sbr.rel (0) target = $region21
  $region20: #{model_forward.1} parent=0 // pred_region
    _
  $region21: #{model_forward.1} parent=0 // pred_fallthru
    _

</llo_original>
